<compile_context>
chip_gen: v7x
topology: tpu7x:2x2x1
jax: 0.10.0
libtpu: 0.0.40
codegen_flags: <defaults>
</compile_context>

<pallas_src>
import math

import numpy as np
import jax
import jax.numpy as jnp
from jax.experimental import pallas as pl
from jax.experimental.pallas import tpu as pltpu


def _round_up(x: int, m: int) -> int:
    return -(-x // m) * m


# ----------------------------------------------------------------------------
# Kernel 1: per-(head, src-tile) projection
#   hsrc_h = feat @ Wfc_h^T                      (tm, Dh)
#   [el | er] = hsrc_h @ [attn_l_h | attn_r_h]   (tm, 2)
# ----------------------------------------------------------------------------
def _gat_proj_kernel(feat_ref, wfc_ref, alr_ref, h_ref, elr_ref):
    x = feat_ref[...]                                                  # (tm, F)
    h = jnp.dot(x, wfc_ref[...], preferred_element_type=jnp.float32)   # (tm, Dh)
    h_ref[...] = h
    elr_ref[...] = jnp.dot(h, alr_ref[...], preferred_element_type=jnp.float32)


# ----------------------------------------------------------------------------
# Kernel 2: per-(head, dst-tile) masked attention + aggregation + residual
#           + bias + ELU (== DGL GATConv), fused with the POI feat_dist branch,
#           the mean with feat_gat and the final ReLU.
# ----------------------------------------------------------------------------
def _gat_attn_kernel(hsrc_ref, el_ref, er_ref, adj_ref, xdst_ref, wres_ref,
                     bgat_ref, poif_ref, ww_ref, beta_ref, o_ref):
    hsrc = hsrc_ref[...]                                   # (S, Dh), resident per head
    mask = adj_ref[...] > 0.0                              # (td, S) 0/1 in-edge mask
    e = el_ref[...] + er_ref[...]                          # (1,S)+(td,1) -> (td,S)
    e = jnp.where(e > 0, e, 0.2 * e)                       # LeakyReLU(0.2), DGL default
    e = jnp.where(mask, e, -jnp.inf)                       # scores only on real edges
    m = jnp.max(e, axis=-1, keepdims=True)
    p = jnp.where(mask, jnp.exp(e - m), 0.0)
    alpha = p / jnp.sum(p, axis=-1, keepdims=True)         # edge softmax per dst node
    # TODO(synk): attn_drop omitted (eval-mode identity).
    rst = jnp.dot(alpha, hsrc, preferred_element_type=jnp.float32)             # aggregate
    rst = rst + jnp.dot(xdst_ref[...], wres_ref[...],
                        preferred_element_type=jnp.float32)                    # residual
    rst = rst + bgat_ref[...]                                                  # GATConv bias
    rst = jnp.where(rst > 0, rst, jnp.exp(rst) - 1.0)                          # ELU
    fd = jnp.dot(poif_ref[...], ww_ref[...],
                 preferred_element_type=jnp.float32) * beta_ref[...]           # feat_dist
    o_ref[...] = jnp.maximum((rst + fd) * 0.5, 0.0).astype(o_ref.dtype)        # mean + ReLU


def gat_forward(feat, adj, wfc, attn_l, attn_r, wres, bias_gat, ww,
                poi_feat_dst, beta_sum, *, num_heads, hidden_size,
                src_tile=None, dst_tile=None):
    """Pallas forward of GAT.forward (eval mode).

    feat:         (S, F)   block[0] src-node features (dst nodes = first D rows)
    adj:          (D, S)   dense 0/1 in-edge mask of block[0]
    wfc, wres:    (H*Dh, F) GATConv fc / residual-fc weights (PyTorch layout)
    attn_l/r:     (H, Dh)  GATConv attention vectors
    bias_gat:     (H*Dh,)  GATConv bias
    ww:           (Dh, F)  self.w weight (bias=False)
    poi_feat_dst: (D, F)   poi_cat_feat gathered at output_nodes
    beta_sum:     (D,)     per-output-node sum of the first <=15 neighbour coefficients
    returns       (D, H, Dh)
    """
    f32 = jnp.float32
    S, F = feat.shape
    D = adj.shape[0]
    H, Dh = num_heads, hidden_size

    # ---- tiles / padding: multiples of 8 rows, no ragged last tile ----------
    tm = src_tile if src_tile is not None else min(_round_up(S, 8), 512)
    td = dst_tile if dst_tile is not None else min(_round_up(D, 8), 512)
    S_pad, D_pad = _round_up(S, tm), _round_up(D, td)

    feat_dst = feat[:D]
    if S_pad != S:
        feat = jnp.pad(feat, ((0, S_pad - S), (0, 0)))
        adj = jnp.pad(adj, ((0, 0), (0, S_pad - S)))       # padded srcs get no edges
    if D_pad != D:
        adj = jnp.pad(adj, ((0, D_pad - D), (0, 0)))
        adj = adj.at[D:, 0].set(1.0)                       # keep padded-row softmax finite
        feat_dst = jnp.pad(feat_dst, ((0, D_pad - D), (0, 0)))
        poi_feat_dst = jnp.pad(poi_feat_dst, ((0, D_pad - D), (0, 0)))
        beta_sum = jnp.pad(beta_sum, (0, D_pad - D))

    # ---- head-major weight layouts (built once in the wrapper) --------------
    wfc3 = wfc.reshape(H, Dh, F).transpose(0, 2, 1).astype(f32)    # (H, F, Dh)
    wres3 = wres.reshape(H, Dh, F).transpose(0, 2, 1).astype(f32)  # (H, F, Dh)
    alr3 = jnp.stack([attn_l, attn_r], axis=-1).astype(f32)        # (H, Dh, 2)
    bias3 = bias_gat.reshape(H, 1, Dh).astype(f32)
    ww_t = jnp.transpose(ww).astype(f32)                           # (F, Dh)
    beta2 = beta_sum.reshape(D_pad, 1).astype(f32)
    feat = feat.astype(f32)
    adj = adj.astype(f32)
    feat_dst = feat_dst.astype(f32)
    poi_feat_dst = poi_feat_dst.astype(f32)

    # ==================== kernel 1: per-head projection =====================
    n_src_tiles = S_pad // tm
    ce1 = pl.CostEstimate(
        flops=int(2 * H * S_pad * (F * Dh + 2 * Dh)),
        transcendentals=0,
        bytes_accessed=int(4 * (H * S_pad * F + H * F * Dh + H * Dh * 2
                                + H * S_pad * (Dh + 2))))
    hsrc3, elr3 = pl.pallas_call(
        _gat_proj_kernel,
        out_shape=(jax.ShapeDtypeStruct((H, S_pad, Dh), f32),
                   jax.ShapeDtypeStruct((H, S_pad, 2), f32)),
        grid_spec=pltpu.PrefetchScalarGridSpec(
            num_scalar_prefetch=0,
            grid=(H, n_src_tiles),
            in_specs=[
                pl.BlockSpec((tm, F), lambda h, j: (j, 0)),            # feat row tile
                pl.BlockSpec((None, F, Dh), lambda h, j: (h, 0, 0)),   # W_fc  (resident/head)
                pl.BlockSpec((None, Dh, 2), lambda h, j: (h, 0, 0)),   # [attn_l|attn_r]
            ],
            out_specs=[
                pl.BlockSpec((None, tm, Dh), lambda h, j: (h, j, 0)),
                pl.BlockSpec((None, tm, 2), lambda h, j: (h, j, 0)),
            ],
        ),
        compiler_params=pltpu.CompilerParams(
            dimension_semantics=("parallel", "parallel")),
        cost_estimate=ce1,
    )(feat, wfc3, alr3)

    # tiny layout plumbing between kernels (lane-dense score row / sublane column)
    el_row = jnp.transpose(elr3[:, :, 0:1], (0, 2, 1))                # (H, 1, S_pad)
    er_col = elr3[:, :D, 1:2]                                         # (H, D, 1)
    if D_pad != D:
        er_col = jnp.pad(er_col, ((0, 0), (0, D_pad - D), (0, 0)))

    # ===== kernel 2: masked attention + aggregation + fused epilogue ========
    n_dst_tiles = D_pad // td
    ce2 = pl.CostEstimate(
        flops=int(H * (2 * D_pad * S_pad * Dh + 4 * D_pad * F * Dh
                       + 8 * D_pad * S_pad + 6 * D_pad * Dh)),
        transcendentals=int(H * D_pad * (S_pad + Dh)),
        bytes_accessed=int(4 * (H * S_pad * (Dh + 1) + H * D_pad
                                + H * (D_pad * S_pad + 2 * D_pad * F + D_pad)
                                + H * (F * Dh + Dh) + F * Dh + H * D_pad * Dh)))
    out3 = pl.pallas_call(
        _gat_attn_kernel,
        out_shape=jax.ShapeDtypeStruct((H, D_pad, Dh), f32),
        grid_spec=pltpu.PrefetchScalarGridSpec(
            num_scalar_prefetch=0,
            grid=(H, n_dst_tiles),
            in_specs=[
                pl.BlockSpec((None, S_pad, Dh), lambda h, i: (h, 0, 0)),  # hsrc (resident/head)
                pl.BlockSpec((None, 1, S_pad), lambda h, i: (h, 0, 0)),   # el row (resident/head)
                pl.BlockSpec((None, td, 1), lambda h, i: (h, i, 0)),      # er column tile
                pl.BlockSpec((td, S_pad), lambda h, i: (i, 0)),           # adjacency tile
                pl.BlockSpec((td, F), lambda h, i: (i, 0)),               # dst feats (residual)
                pl.BlockSpec((None, F, Dh), lambda h, i: (h, 0, 0)),      # W_res (resident/head)
                pl.BlockSpec((None, 1, Dh), lambda h, i: (h, 0, 0)),      # GATConv bias
                pl.BlockSpec((td, F), lambda h, i: (i, 0)),               # gathered poi_cat_feat
                pl.BlockSpec((F, Dh), lambda h, i: (0, 0)),               # self.w^T (resident)
                pl.BlockSpec((td, 1), lambda h, i: (i, 0)),               # beta sums
            ],
            out_specs=pl.BlockSpec((None, td, Dh), lambda h, i: (h, i, 0)),
        ),
        compiler_params=pltpu.CompilerParams(
            dimension_semantics=("parallel", "parallel")),
        cost_estimate=ce2,
    )(hsrc3, el_row, er_col, adj, feat_dst, wres3, bias3,
      poi_feat_dst, ww_t, beta2)

    return jnp.transpose(out3[:, :D, :], (1, 0, 2))                   # (D, H, Dh)


if __name__ == "__main__":
    num_poi = 64
    num_src, num_dst = 48, 16            # block[0]: 48 src nodes -> 16 output (dst) nodes
    input_size, hidden_size, num_heads = 32, 32, 2

    key = jax.random.PRNGKey(0)
    ks = jax.random.split(key, 11)

    feat = jax.random.normal(ks[0], (num_src, input_size), jnp.float32)

    bound = 1.0 / math.sqrt(input_size)
    wfc = jax.random.uniform(ks[1], (num_heads * hidden_size, input_size),
                             jnp.float32, -bound, bound)
    attn_l = 0.1 * jax.random.normal(ks[2], (num_heads, hidden_size), jnp.float32)
    attn_r = 0.1 * jax.random.normal(ks[3], (num_heads, hidden_size), jnp.float32)
    wres = jax.random.uniform(ks[4], (num_heads * hidden_size, input_size),
                              jnp.float32, -bound, bound)
    bias_gat = 0.01 * jax.random.normal(ks[5], (num_heads * hidden_size,), jnp.float32)
    ww = jax.random.uniform(ks[6], (hidden_size, input_size), jnp.float32, -bound, bound)

    # block[0] in-edge mask; dst nodes are the first num_dst src nodes (self edge kept)
    adj = (jax.random.uniform(ks[7], (num_dst, num_src)) < 0.3).astype(jnp.float32)
    adj = adj.at[jnp.arange(num_dst), jnp.arange(num_dst)].set(1.0)

    poi_cat_feat = jax.random.normal(ks[8], (num_poi, input_size), jnp.float32)
    poi_attention_coefficient = jax.random.uniform(ks[9], (num_poi, num_poi), jnp.float32)
    output_nodes = jax.random.permutation(ks[10], num_poi)[:num_dst]

    # ragged host-side neighbour lists (same role as the module's poi_neighbors dict)
    poi_neighbors = {i: [(i * 7 + 3 * k + 1) % num_poi for k in range(3 + (i % 20))]
                     for i in range(num_poi)}

    # Host loop from GAT.forward: beta_sum[i] = sum of first <=15 neighbour coefficients.
    coeff_np = np.asarray(poi_attention_coefficient)
    out_np = np.asarray(output_nodes)
    beta_sum = np.zeros((num_dst,), np.float32)
    for i, nid in enumerate(out_np):
        cnt = 0
        for j in poi_neighbors[int(nid)]:
            beta_sum[i] += coeff_np[int(nid), j]
            cnt += 1
            if cnt == 15:
                break
    beta_sum = jnp.asarray(beta_sum)
    poi_feat_dst = poi_cat_feat[output_nodes]              # (num_dst, input_size)

    feat_out = gat_forward(feat, adj, wfc, attn_l, attn_r, wres, bias_gat, ww,
                           poi_feat_dst, beta_sum,
                           num_heads=num_heads, hidden_size=hidden_size,
                           src_tile=16, dst_tile=8)
    feat_out = jax.block_until_ready(feat_out)

    # -------------------- pure-JAX reference --------------------
    hsrc = (feat @ wfc.T).reshape(num_src, num_heads, hidden_size)
    el = jnp.einsum("shd,hd->sh", hsrc, attn_l)
    er = jnp.einsum("shd,hd->sh", hsrc[:num_dst], attn_r)
    e = el[None, :, :] + er[:, None, :]
    e = jnp.where(e > 0, e, 0.2 * e)
    e = jnp.where(adj[:, :, None] > 0, e, -jnp.inf)
    alpha = jax.nn.softmax(e, axis=1)
    rst = jnp.einsum("dsh,shk->dhk", alpha, hsrc)
    rst = rst + (feat[:num_dst] @ wres.T).reshape(num_dst, num_heads, hidden_size)
    rst = rst + bias_gat.reshape(1, num_heads, hidden_size)
    rst = jnp.where(rst > 0, rst, jnp.exp(rst) - 1.0)      # ELU
    fd = (poi_feat_dst @ ww.T) * beta_sum[:, None]
    ref = jnp.maximum((rst + fd[:, None, :]) / 2.0, 0.0)

    assert feat_out.shape == (num_dst, num_heads, hidden_size)
    max_err = float(jnp.max(jnp.abs(feat_out - ref)))
    assert jnp.allclose(feat_out, ref, atol=1e-4, rtol=1e-4), max_err

    print("KERNEL_OK")
</pallas_src>

<mosaic_0001>
module attributes {stable_mosaic.version = 11 : i64} {
  func.func @_gat_proj_kernel(%arg0: i32, %arg1: i32, %arg2: memref<16x32xf32, #tpu.memory_space<vmem>>, %arg3: memref<1x32x32xf32, #tpu.memory_space<vmem>>, %arg4: memref<1x32x2xf32, #tpu.memory_space<vmem>>, %arg5: memref<1x16x32xf32, #tpu.memory_space<vmem>>, %arg6: memref<1x16x2xf32, #tpu.memory_space<vmem>>) attributes {dimension_semantics = [#tpu.dimension_semantics<parallel>, #tpu.dimension_semantics<parallel>], iteration_bounds = array<i64: 2, 3>, scalar_prefetch = 0 : i64, scratch_operands = 0 : i64, tpu.core_type = #tpu.core_type<tc>, window_params = [{transform_indices = @transform_0, window_bounds = array<i64: 16, 32>}, {transform_indices = @transform_1, window_bounds = array<i64: 1, 32, 32>}, {transform_indices = @transform_2, window_bounds = array<i64: 1, 32, 2>}, {transform_indices = @transform_3, window_bounds = array<i64: 1, 16, 32>}, {transform_indices = @transform_4, window_bounds = array<i64: 1, 16, 2>}]} {
    %c0 = arith.constant 0 : index
    %c0_0 = arith.constant 0 : index
    %0 = vector.load %arg2[%c0, %c0_0] : memref<16x32xf32, #tpu.memory_space<vmem>>, vector<16x32xf32>
    %c0_1 = arith.constant 0 : index
    %c0_2 = arith.constant 0 : index
    %c0_3 = arith.constant 0 : index
    %1 = vector.load %arg3[%c0_1, %c0_2, %c0_3] : memref<1x32x32xf32, #tpu.memory_space<vmem>>, vector<1x32x32xf32>
    %2 = vector.shape_cast %1 : vector<1x32x32xf32> to vector<32x32xf32>
    %cst = arith.constant dense<0.000000e+00> : vector<16x32xf32>
    %3 = tpu.matmul %0, %2, %cst {dimension_numbers = #tpu.dot_dimension_numbers<[1], [0], [0], [1], [0, 0, 1, 1], [], []>} : vector<16x32xf32>, vector<32x32xf32>, vector<16x32xf32> -> vector<16x32xf32>
    %c0_4 = arith.constant 0 : index
    %c0_5 = arith.constant 0 : index
    %c0_6 = arith.constant 0 : index
    %4 = vector.load %arg5[%c0_4, %c0_5, %c0_6] : memref<1x16x32xf32, #tpu.memory_space<vmem>>, vector<1x16x32xf32>
    %5 = vector.shape_cast %4 : vector<1x16x32xf32> to vector<16x32xf32>
    %6 = vector.shape_cast %3 : vector<16x32xf32> to vector<1x16x32xf32>
    tpu.vector_store %arg5[%c0_4, %c0_5, %c0_6], %6 {strides = array<i32>} : memref<1x16x32xf32, #tpu.memory_space<vmem>>, vector<1x16x32xf32>,
    %c0_7 = arith.constant 0 : index
    %c0_8 = arith.constant 0 : index
    %c0_9 = arith.constant 0 : index
    %7 = vector.load %arg4[%c0_7, %c0_8, %c0_9] : memref<1x32x2xf32, #tpu.memory_space<vmem>>, vector<1x32x2xf32>
    %8 = vector.shape_cast %7 : vector<1x32x2xf32> to vector<32x2xf32>
    %cst_10 = arith.constant dense<0.000000e+00> : vector<16x2xf32>
    %9 = tpu.matmul %3, %8, %cst_10 {dimension_numbers = #tpu.dot_dimension_numbers<[1], [0], [0], [1], [0, 0, 1, 1], [], []>} : vector<16x32xf32>, vector<32x2xf32>, vector<16x2xf32> -> vector<16x2xf32>
    %c0_11 = arith.constant 0 : index
    %c0_12 = arith.constant 0 : index
    %c0_13 = arith.constant 0 : index
    %10 = vector.load %arg6[%c0_11, %c0_12, %c0_13] : memref<1x16x2xf32, #tpu.memory_space<vmem>>, vector<1x16x2xf32>
    %11 = vector.shape_cast %10 : vector<1x16x2xf32> to vector<16x2xf32>
    %12 = vector.shape_cast %9 : vector<16x2xf32> to vector<1x16x2xf32>
    tpu.vector_store %arg6[%c0_11, %c0_12, %c0_13], %12 {strides = array<i32>} : memref<1x16x2xf32, #tpu.memory_space<vmem>>, vector<1x16x2xf32>,
    return
  }
  func.func @transform_0(%arg0: i32, %arg1: i32) -> (i32, i32) {
    %c0_i32 = arith.constant 0 : i32
    %c0_i32_0 = arith.constant 0 : i32
    return %arg1, %c0_i32 : i32, i32
  }
  func.func @transform_1(%arg0: i32, %arg1: i32) -> (i32, i32, i32) {
    %c0_i32 = arith.constant 0 : i32
    %c0_i32_0 = arith.constant 0 : i32
    %c0_i32_1 = arith.constant 0 : i32
    return %arg0, %c0_i32, %c0_i32_0 : i32, i32, i32
  }
  func.func @transform_2(%arg0: i32, %arg1: i32) -> (i32, i32, i32) {
    %c0_i32 = arith.constant 0 : i32
    %c0_i32_0 = arith.constant 0 : i32
    %c0_i32_1 = arith.constant 0 : i32
    return %arg0, %c0_i32, %c0_i32_0 : i32, i32, i32
  }
  func.func @transform_3(%arg0: i32, %arg1: i32) -> (i32, i32, i32) {
    %c0_i32 = arith.constant 0 : i32
    %c0_i32_0 = arith.constant 0 : i32
    return %arg0, %arg1, %c0_i32 : i32, i32, i32
  }
  func.func @transform_4(%arg0: i32, %arg1: i32) -> (i32, i32, i32) {
    %c0_i32 = arith.constant 0 : i32
    %c0_i32_0 = arith.constant 0 : i32
    return %arg0, %arg1, %c0_i32 : i32, i32, i32
  }
}

</mosaic_0001>

<llo_original>
// kernel: tpu_custom_call.1
$region0: #{tpu_custom_call.1}
  #allocation0 [shape = 'u32[]', space=smem, size = 0x4, offset = 0x4, fixed_abs, tag = 'smem constant byte address 0x4 - core index']
  #allocation1 [shape = 'u32[144,128]{1,0:T(1,128)}', space=vmem, size = 0x12000, scoped, tag = 'internal scratch']
  %s0 = inlined_call_operand.vmem [shape: f32[48,32], index: 0, kind: input, shape index: {}]
  %s1 = inlined_call_operand.vmem [shape: f32[2,32,32], index: 1, kind: input, shape index: {}]
  %s2 = inlined_call_operand.vmem [shape: f32[2,32,2], index: 2, kind: input, shape index: {}]
  %s3 = inlined_call_operand.vmem [shape: f32[2,48,32], index: 3, kind: output, shape index: {0}]
  %s4 = inlined_call_operand.vmem [shape: f32[2,48,2], index: 4, kind: output, shape index: {1}]
  %5 = xla_tuple %s3, %s4
  %s6 = sld [smem:[#allocation0]]
  $region53: #{tpu_custom_call.1} parent=0
    _
  %s8 = ssub.s32 1, %s6
  %s9 = scalar_select 0, %s8, %s6
  loop: start=0, step=1, limit=8
  $region2: #{tpu_custom_call.1} parent=0 // loop_pre_header
    _
  $region3: #{tpu_custom_call.1} parent=0 // loop_header
    %s11 = sphi 0, %s15
    %p12 = scmp.ge.s32.totalorder %s11, 8
    %s18 = sphi 0, %s30
    %s19 = sphi 0, %s26
    %s20 = sphi 0, %s18
    %s21 = sphi 0, %s19
    %s22 = sphi 0, %s20
    %s23 = sphi 0, %s21
    %s33 = sphi 0, %s35
    %s36 = sphi 0, %s33
    %s37 = sphi 0, %s36
    %s53 = sphi 0, %s37
    %s59 = sphi 0, %s61
    %s62 = sphi 0, %s59
    %s63 = sphi 0, %s62
    %s79 = sphi 0, %s63
    %s85 = sphi 0, %s87
    %s88 = sphi 0, %s85
    %s89 = sphi 0, %s88
    %s105 = sphi 0, %s89
    %s113 = sphi 0, %s115
    %s116 = sphi 0, %s113
    %s117 = sphi 0, %s116
    %s133 = sphi 0, %s117
    %s141 = sphi 0, %s143
    %s144 = sphi 0, %s141
    %s145 = sphi 0, %s144
    %s161 = sphi 0, %s145
  $region4: #{tpu_custom_call.1} parent=0 // loop_header_branch
    %14 = sbr.rel (%p12) target = $region8
  $region5: #{tpu_custom_call.1} parent=0 // loop_body
    %s16 = ssub.s32 %s11, 1
    %s17 = ssub.s32 %s11, 2
    %s24 = sadd.s32 1, %s19
    %p25 = scmp.ge.s32.totalorder %s24, 3
    %s26 = scalar_select %p25, 0, %s24
    %s27 = sadd.s32 1, %s18
    %s28 = scalar_select %p25, %s27, %s18
    %p29 = scmp.ge.s32.totalorder %s28, 2
    %s30 = scalar_select %p29, 0, %s28
    %s31 = ssub.s32 %s19, %s26
    %p32 = scmp.eq.s32.totalorder %s31, 0
    %s34 = sadd.s32 %s33, 1
    %s35 = scalar_select %p32, %s33, %s34
    %p38 = pneg %p32
    %p39 = scmp.eq.s32.totalorder %s11, 5
    %p40 = por %p38, %p39
    %p41 = scmp.ne.s32.totalorder %s33, %s36
    %p42 = scmp.eq.s32.totalorder %s11, 0
    %p43 = por %p41, %p42
    %p44 = scmp.ne.s32.totalorder %s33, %s36
    %p45 = scmp.eq.s32.totalorder %s16, 5
    %p46 = por %p44, %p45
    %p47 = scmp.ne.s32.totalorder %s36, %s37
    %p48 = scmp.eq.s32.totalorder %s16, 0
    %p49 = por %p47, %p48
    %p50 = scmp.ne.s32.totalorder %s36, %s37
    %p51 = scmp.eq.s32.totalorder %s17, 5
    %p52 = por %p50, %p51
    %p54 = scmp.ne.s32.totalorder %s37, %s53
    %p55 = scmp.eq.s32.totalorder %s17, 0
    %p56 = por %p54, %p55
    %s57 = ssub.s32 %s18, %s30
    %p58 = scmp.eq.s32.totalorder %s57, 0
    %s60 = sadd.s32 %s59, 1
    %s61 = scalar_select %p58, %s59, %s60
    %p64 = pneg %p58
    %p65 = scmp.eq.s32.totalorder %s11, 5
    %p66 = por %p64, %p65
    %p67 = scmp.ne.s32.totalorder %s59, %s62
    %p68 = scmp.eq.s32.totalorder %s11, 0
    %p69 = por %p67, %p68
    %p70 = scmp.ne.s32.totalorder %s59, %s62
    %p71 = scmp.eq.s32.totalorder %s16, 5
    %p72 = por %p70, %p71
    %p73 = scmp.ne.s32.totalorder %s62, %s63
    %p74 = scmp.eq.s32.totalorder %s16, 0
    %p75 = por %p73, %p74
    %p76 = scmp.ne.s32.totalorder %s62, %s63
    %p77 = scmp.eq.s32.totalorder %s17, 5
    %p78 = por %p76, %p77
    %p80 = scmp.ne.s32.totalorder %s63, %s79
    %p81 = scmp.eq.s32.totalorder %s17, 0
    %p82 = por %p80, %p81
    %s83 = ssub.s32 %s18, %s30
    %p84 = scmp.eq.s32.totalorder %s83, 0
    %s86 = sadd.s32 %s85, 1
    %s87 = scalar_select %p84, %s85, %s86
    %p90 = pneg %p84
    %p91 = scmp.eq.s32.totalorder %s11, 5
    %p92 = por %p90, %p91
    %p93 = scmp.ne.s32.totalorder %s85, %s88
    %p94 = scmp.eq.s32.totalorder %s11, 0
    %p95 = por %p93, %p94
    %p96 = scmp.ne.s32.totalorder %s85, %s88
    %p97 = scmp.eq.s32.totalorder %s16, 5
    %p98 = por %p96, %p97
    %p99 = scmp.ne.s32.totalorder %s88, %s89
    %p100 = scmp.eq.s32.totalorder %s16, 0
    %p101 = por %p99, %p100
    %p102 = scmp.ne.s32.totalorder %s88, %s89
    %p103 = scmp.eq.s32.totalorder %s17, 5
    %p104 = por %p102, %p103
    %p106 = scmp.ne.s32.totalorder %s89, %s105
    %p107 = scmp.eq.s32.totalorder %s17, 0
    %p108 = por %p106, %p107
    %s109 = ssub.s32 %s18, %s30
    %s110 = ssub.s32 %s19, %s26
    %s111 = sor.u32 %s109, %s110
    %p112 = scmp.eq.s32.totalorder %s111, 0
    %s114 = sadd.s32 %s113, 1
    %s115 = scalar_select %p112, %s113, %s114
    %p118 = pneg %p112
    %p119 = scmp.eq.s32.totalorder %s11, 5
    %p120 = por %p118, %p119
    %p121 = scmp.ne.s32.totalorder %s113, %s116
    %p122 = scmp.eq.s32.totalorder %s11, 0
    %p123 = por %p121, %p122
    %p124 = scmp.ne.s32.totalorder %s113, %s116
    %p125 = scmp.eq.s32.totalorder %s16, 5
    %p126 = por %p124, %p125
    %p127 = scmp.ne.s32.totalorder %s116, %s117
    %p128 = scmp.eq.s32.totalorder %s16, 0
    %p129 = por %p127, %p128
    %p130 = scmp.ne.s32.totalorder %s116, %s117
    %p131 = scmp.eq.s32.totalorder %s17, 5
    %p132 = por %p130, %p131
    %p134 = scmp.ne.s32.totalorder %s117, %s133
    %p135 = scmp.eq.s32.totalorder %s17, 0
    %p136 = por %p134, %p135
    %s137 = ssub.s32 %s18, %s30
    %s138 = ssub.s32 %s19, %s26
    %s139 = sor.u32 %s137, %s138
    %p140 = scmp.eq.s32.totalorder %s139, 0
    %s142 = sadd.s32 %s141, 1
    %s143 = scalar_select %p140, %s141, %s142
    %p146 = pneg %p140
    %p147 = scmp.eq.s32.totalorder %s11, 5
    %p148 = por %p146, %p147
    %p149 = scmp.ne.s32.totalorder %s141, %s144
    %p150 = scmp.eq.s32.totalorder %s11, 0
    %p151 = por %p149, %p150
    %p152 = scmp.ne.s32.totalorder %s141, %s144
    %p153 = scmp.eq.s32.totalorder %s16, 5
    %p154 = por %p152, %p153
    %p155 = scmp.ne.s32.totalorder %s144, %s145
    %p156 = scmp.eq.s32.totalorder %s16, 0
    %p157 = por %p155, %p156
    %p158 = scmp.ne.s32.totalorder %s144, %s145
    %p159 = scmp.eq.s32.totalorder %s17, 5
    %p160 = por %p158, %p159
    %p162 = scmp.ne.s32.totalorder %s145, %s161
    %p163 = scmp.eq.s32.totalorder %s17, 0
    %p164 = por %p162, %p163
    %p165 = scmp.le.s32.totalorder 1, %s11
    %p166 = scmp.lt.s32.totalorder %s11, 7
    %p167 = pnand %p165, %p166
    %p168 = pneg %p167
    // Predicated region
    $region9: #{tpu_custom_call.1} parent=5 // pred_check
      _
    $region10: #{tpu_custom_call.1} parent=5 // pred_check_branch
      %170 = sbr.rel (%p167) target = $region12
    $region11: #{tpu_custom_call.1} parent=5 // pred_region
      %s171 = ssub.s32 %s11, 1
    $region12: #{tpu_custom_call.1} parent=5 // pred_fallthru
      _
    %p172 = scmp.lt.s32.totalorder %s11, 6
    // Predicated region
    $region13: #{tpu_custom_call.1} parent=5 // pred_check
      %p173 = pneg %p172
    $region14: #{tpu_custom_call.1} parent=5 // pred_check_branch
      %175 = sbr.rel (%p173) target = $region16
    $region15: #{tpu_custom_call.1} parent=5 // pred_region
      // Predicated region
      $region17: #{tpu_custom_call.1} parent=15 // pred_check
        %p176 = pneg %p43
      $region18: #{tpu_custom_call.1} parent=15 // pred_check_branch
        %178 = sbr.rel (%p176) target = $region20
      $region19: #{tpu_custom_call.1} parent=15 // pred_region
        %s179 = smul.u32 2, %s19
        %p180 = scmp.lt.s32.totalorder %s179, 5
        %s181 = scalar_select %p180, %s179, 5
        %s182 = smul.addr %s181, 8
        %s183 = scalar_lea.vmem %s0, %s182
        %s184 = smul.u32 2, %s19
      $region20: #{tpu_custom_call.1} parent=15 // pred_fallthru
        _
      // Predicated region
      $region21: #{tpu_custom_call.1} parent=15 // pred_check
        %p185 = pneg %p69
      $region22: #{tpu_custom_call.1} parent=15 // pred_check_branch
        %187 = sbr.rel (%p185) target = $region24
      $region23: #{tpu_custom_call.1} parent=15 // pred_region
        %p188 = scmp.lt.s32.totalorder %s18, 1
        %s189 = scalar_select %p188, %s18, 1
        %s190 = smul.addr %s189, 4
        %s191 = smul.addr %s190, 8
        %s192 = scalar_lea.vmem %s1, %s191
      $region24: #{tpu_custom_call.1} parent=15 // pred_fallthru
        _
      // Predicated region
      $region25: #{tpu_custom_call.1} parent=15 // pred_check
        %p193 = pneg %p95
      $region26: #{tpu_custom_call.1} parent=15 // pred_check_branch
        %195 = sbr.rel (%p193) target = $region28
      $region27: #{tpu_custom_call.1} parent=15 // pred_region
        %p196 = scmp.lt.s32.totalorder %s18, 1
        %s197 = scalar_select %p196, %s18, 1
        %s198 = smul.addr %s197, 4
        %s199 = smul.addr %s198, 8
        %s200 = scalar_lea.vmem %s2, %s199
      $region28: #{tpu_custom_call.1} parent=15 // pred_fallthru
        _
    $region16: #{tpu_custom_call.1} parent=5 // pred_fallthru
      _
    %p201 = scmp.le.s32.totalorder 1, %s11
    %p202 = scmp.lt.s32.totalorder %s11, 7
    %p203 = pnand %p201, %p202
    %p204 = pneg %p203
    // Predicated region
    $region29: #{tpu_custom_call.1} parent=5 // pred_check
      _
    $region30: #{tpu_custom_call.1} parent=5 // pred_check_branch
      %206 = sbr.rel (%p203) target = $region32
    $region31: #{tpu_custom_call.1} parent=5 // pred_region
      %s207 = ssub.s32 %s11, 1
      %s208 = smul.u32 2, %s21
      %p209 = scmp.lt.s32.totalorder %s208, 5
      %s210 = scalar_select %p209, %s208, 5
      %s211 = smul.addr %s210, 8
      %s212 = scalar_lea.vmem %s0, %s211
      %p213 = pneg %p49
      %p214 = pneg %p46
      %p215 = scmp.lt.s32.totalorder %s20, 1
      %s216 = scalar_select %p215, %s20, 1
      %s217 = smul.addr %s216, 4
      %s218 = smul.addr %s217, 8
      %s219 = scalar_lea.vmem %s1, %s218
      %p220 = pneg %p75
      %p221 = pneg %p72
      %p222 = scmp.lt.s32.totalorder %s20, 1
      %s223 = scalar_select %p222, %s20, 1
      %s224 = smul.addr %s223, 4
      %s225 = smul.addr %s224, 8
      %s226 = scalar_lea.vmem %s2, %s225
      %p227 = pneg %p101
      %p228 = pneg %p98
      %p229 = pneg %p129
      %p230 = pneg %p126
      %s231 = smul.u32 2, %s21
      %p232 = scmp.lt.s32.totalorder %s20, 1
      %s233 = scalar_select %p232, %s20, 1
      %p234 = scmp.lt.s32.totalorder %s231, 5
      %s235 = scalar_select %p234, %s231, 5
      %s236 = smul.addr %s233, 6
      %s237 = sadd.s32 %s235, %s236
      %s238 = smul.addr %s237, 8
      %s239 = scalar_lea.vmem %s3, %s238
      %p240 = pneg %p157
      %p241 = pneg %p154
      %s242 = smul.u32 2, %s21
      %p243 = scmp.lt.s32.totalorder %s20, 1
      %s244 = scalar_select %p243, %s20, 1
      %p245 = scmp.lt.s32.totalorder %s242, 5
      %s246 = scalar_select %p245, %s242, 5
      %s247 = smul.addr %s244, 6
      %s248 = sadd.s32 %s246, %s247
      %s249 = smul.addr %s248, 8
      %s250 = scalar_lea.vmem %s4, %s249
      %s251 = smul.u32 2, %s21
      %p252 = scmp.lt.s32.totalorder %s251, 5
      %s253 = scalar_select %p252, %s251, 5
      %s254 = smul.addr %s253, 8
      %s255 = scalar_lea.vmem %s0, %s254
      %s256 = smul.u32 2, %s21
      %p257 = scmp.lt.s32.totalorder %s20, 1
      %s258 = scalar_select %p257, %s20, 1
      %s259 = smul.addr %s258, 4
      %s260 = smul.addr %s259, 8
      %s261 = scalar_lea.vmem %s1, %s260
      %p262 = scmp.lt.s32.totalorder %s20, 1
      %s263 = scalar_select %p262, %s20, 1
      %s264 = smul.addr %s263, 4
      %s265 = smul.addr %s264, 8
      %s266 = scalar_lea.vmem %s2, %s265
      %s267 = smul.u32 2, %s21
      %p268 = scmp.lt.s32.totalorder %s20, 1
      %s269 = scalar_select %p268, %s20, 1
      %p270 = scmp.lt.s32.totalorder %s267, 5
      %s271 = scalar_select %p270, %s267, 5
      %s272 = smul.addr %s269, 6
      %s273 = sadd.s32 %s271, %s272
      %s274 = smul.addr %s273, 8
      %s275 = scalar_lea.vmem %s3, %s274
      %s276 = smul.u32 2, %s21
      %s277 = smul.u32 2, %s21
      %p278 = scmp.lt.s32.totalorder %s20, 1
      %s279 = scalar_select %p278, %s20, 1
      %p280 = scmp.lt.s32.totalorder %s277, 5
      %s281 = scalar_select %p280, %s277, 5
      %s282 = smul.addr %s279, 6
      %s283 = sadd.s32 %s281, %s282
      %s284 = smul.addr %s283, 8
      %s285 = scalar_lea.vmem %s4, %s284
      %s286 = smul.u32 2, %s21
      %v287 = vld [vmem:[%s255] sm:$0xff]
      %v288 = vld [vmem:[%s255 + $0x8] sm:$0xff]
      %v289 = vld [vmem:[%s261] sm:$0xff]
      %v290 = vld [vmem:[%s261 + $0x8] sm:$0xff]
      %v291 = vld [vmem:[%s261 + $0x10] sm:$0xff]
      %v292 = vld [vmem:[%s261 + $0x18] sm:$0xff]
      %vm293 = vcmask 261120
      %v295 = vsel %vm293, %v287, 0
      %v298 = vsel %vm293, %v288, 0
      %300 = vmatprep.subr.mxu0 0.0
      %301 = vmatpush1.msra.mxu0 %v289
      %302 = vmatprep.subr.mxu0 0.0
      %303 = vmatpush1.msra.mxu0 %v290
      %304 = vmatprep.subr.mxu0 0.0
      %305 = vmatpush1.msra.mxu0 %v291
      %306 = vmatprep.subr.mxu0 0.0
      %307 = vmatpush1.msra.mxu0 %v292
      %308 = vmatprep.subr.mxu0 0.0
      %309 = vmatpush1.msra.mxu0 0.0
      %310 = vmatprep.subr.mxu0 0.0
      %311 = vmatpush1.msra.mxu0 0.0
      %312 = vmatprep.subr.mxu0 0.0
      %313 = vmatpush1.msra.mxu0 0.0
      %314 = vmatprep.subr.mxu0 0.0
      %315 = vmatpush1.msra.mxu0 0.0
      %316 = vmatprep.subr.mxu0 0.0
      %317 = vmatpush1.msra.mxu0 0.0
      %318 = vmatprep.subr.mxu0 0.0
      %319 = vmatpush1.msra.mxu0 0.0
      %320 = vmatprep.subr.mxu0 0.0
      %321 = vmatpush1.msra.mxu0 0.0
      %322 = vmatprep.subr.mxu0 0.0
      %323 = vmatpush1.msra.mxu0 0.0
      %324 = vmatprep.subr.mxu0 0.0
      %325 = vmatpush1.msra.mxu0 0.0
      %326 = vmatprep.subr.mxu0 0.0
      %327 = vmatpush1.msra.mxu0 0.0
      %328 = vmatprep.subr.mxu0 0.0
      %329 = vmatpush1.msra.mxu0 0.0
      %330 = vmatprep.subr.mxu0 0.0
      %331 = vmatpush1.msra.mxu0 0.0
      %332 = vmatprep.subr.mxu0 0.0
      %333 = vmatpush1.msra.mxu0 0.0
      %334 = vmatprep.subr.mxu0 0.0
      %335 = vmatpush1.msra.mxu0 0.0
      %336 = vmatprep.subr.mxu0 0.0
      %337 = vmatpush1.msra.mxu0 0.0
      %338 = vmatprep.subr.mxu0 0.0
      %339 = vmatpush1.msra.mxu0 0.0
      %340 = vmatprep.subr.mxu0 0.0
      %341 = vmatpush1.msra.mxu0 0.0
      %342 = vmatprep.subr.mxu0 0.0
      %343 = vmatpush1.msra.mxu0 0.0
      %344 = vmatprep.subr.mxu0 0.0
      %345 = vmatpush1.msra.mxu0 0.0
      %346 = vmatprep.subr.mxu0 0.0
      %347 = vmatpush1.msra.mxu0 0.0
      %348 = vmatprep.subr.mxu0 0.0
      %349 = vmatpush1.msra.mxu0 0.0
      %350 = vmatprep.subr.mxu0 0.0
      %351 = vmatpush1.msra.mxu0 0.0
      %352 = vmatprep.subr.mxu0 0.0
      %353 = vmatpush1.msra.mxu0 0.0
      %354 = vmatprep.subr.mxu0 0.0
      %355 = vmatpush1.msra.mxu0 0.0
      %356 = vmatprep.subr.mxu0 0.0
      %357 = vmatpush1.msra.mxu0 0.0
      %358 = vmatprep.subr.mxu0 0.0
      %359 = vmatpush1.msra.mxu0 0.0
      %360 = vmatprep.subr.mxu0 0.0
      %361 = vmatpush1.msra.mxu0 0.0
      %362 = vmatprep.subr.mxu0 0.0
      %363 = vmatpush1.msra.mxu0 0.0
      %364 = vmatprep.mubr.f32.mxu0 0.0
      %365 = vmatmul.mubr.f32.gmra.mrb[0].mxu0 %v295
      %v366 = vpop.f32.mrb[0].mxu0
      %v367 = vadd.f32 0.0, %v366
      %v368 = vpop.f32.mrb[0].mxu0
      %369 = vmatprep.mubr.f32.mxu0 0.0
      %370 = vmatmul.mubr.f32.gmra.mrb[0].mxu0 %v298
      %v371 = vpop.f32.mrb[0].mxu0
      %v372 = vadd.f32 0.0, %v371
      %v373 = vpop.f32.mrb[0].mxu0
      %374 = vdwg.mxu0
      %375 = vst.msk [vmem:[%s275] sm:$0xff] %vm293, %v367
      %376 = vst.msk [vmem:[%s275 + $0x8] sm:$0xff] %vm293, %v372
      %v377 = vld [vmem:[%s266] sm:$0xff]
      %v378 = vld [vmem:[%s266 + $0x8] sm:$0xff]
      %v379 = vld [vmem:[%s266 + $0x10] sm:$0xff]
      %v380 = vld [vmem:[%s266 + $0x18] sm:$0xff]
      %v382 = vsel %vm293, %v367, 0
      %v385 = vsel %vm293, %v372, 0
      %387 = vmatprep.subr.mxu0 0.0
      %388 = vmatpush1.msra.mxu0 %v377
      %389 = vmatprep.subr.mxu0 0.0
      %390 = vmatpush1.msra.mxu0 %v378
      %391 = vmatprep.subr.mxu0 0.0
      %392 = vmatpush1.msra.mxu0 %v379
      %393 = vmatprep.subr.mxu0 0.0
      %394 = vmatpush1.msra.mxu0 %v380
      %395 = vmatprep.subr.mxu0 0.0
      %396 = vmatpush1.msra.mxu0 0.0
      %397 = vmatprep.subr.mxu0 0.0
      %398 = vmatpush1.msra.mxu0 0.0
      %399 = vmatprep.subr.mxu0 0.0
      %400 = vmatpush1.msra.mxu0 0.0
      %401 = vmatprep.subr.mxu0 0.0
      %402 = vmatpush1.msra.mxu0 0.0
      %403 = vmatprep.subr.mxu0 0.0
      %404 = vmatpush1.msra.mxu0 0.0
      %405 = vmatprep.subr.mxu0 0.0
      %406 = vmatpush1.msra.mxu0 0.0
      %407 = vmatprep.subr.mxu0 0.0
      %408 = vmatpush1.msra.mxu0 0.0
      %409 = vmatprep.subr.mxu0 0.0
      %410 = vmatpush1.msra.mxu0 0.0
      %411 = vmatprep.subr.mxu0 0.0
      %412 = vmatpush1.msra.mxu0 0.0
      %413 = vmatprep.subr.mxu0 0.0
      %414 = vmatpush1.msra.mxu0 0.0
      %415 = vmatprep.subr.mxu0 0.0
      %416 = vmatpush1.msra.mxu0 0.0
      %417 = vmatprep.subr.mxu0 0.0
      %418 = vmatpush1.msra.mxu0 0.0
      %419 = vmatprep.subr.mxu0 0.0
      %420 = vmatpush1.msra.mxu0 0.0
      %421 = vmatprep.subr.mxu0 0.0
      %422 = vmatpush1.msra.mxu0 0.0
      %423 = vmatprep.subr.mxu0 0.0
      %424 = vmatpush1.msra.mxu0 0.0
      %425 = vmatprep.subr.mxu0 0.0
      %426 = vmatpush1.msra.mxu0 0.0
      %427 = vmatprep.subr.mxu0 0.0
      %428 = vmatpush1.msra.mxu0 0.0
      %429 = vmatprep.subr.mxu0 0.0
      %430 = vmatpush1.msra.mxu0 0.0
      %431 = vmatprep.subr.mxu0 0.0
      %432 = vmatpush1.msra.mxu0 0.0
      %433 = vmatprep.subr.mxu0 0.0
      %434 = vmatpush1.msra.mxu0 0.0
      %435 = vmatprep.subr.mxu0 0.0
      %436 = vmatpush1.msra.mxu0 0.0
      %437 = vmatprep.subr.mxu0 0.0
      %438 = vmatpush1.msra.mxu0 0.0
      %439 = vmatprep.subr.mxu0 0.0
      %440 = vmatpush1.msra.mxu0 0.0
      %441 = vmatprep.subr.mxu0 0.0
      %442 = vmatpush1.msra.mxu0 0.0
      %443 = vmatprep.subr.mxu0 0.0
      %444 = vmatpush1.msra.mxu0 0.0
      %445 = vmatprep.subr.mxu0 0.0
      %446 = vmatpush1.msra.mxu0 0.0
      %447 = vmatprep.subr.mxu0 0.0
      %448 = vmatpush1.msra.mxu0 0.0
      %449 = vmatprep.subr.mxu0 0.0
      %450 = vmatpush1.msra.mxu0 0.0
      %451 = vmatprep.mubr.f32.mxu0 0.0
      %452 = vmatmul.mubr.f32.gmra.mrb[0].mxu0 %v382
      %v453 = vpop.f32.mrb[0].mxu0
      %v454 = vadd.f32 0.0, %v453
      %v455 = vpop.f32.mrb[0].mxu0
      %456 = vmatprep.mubr.f32.mxu0 0.0
      %457 = vmatmul.mubr.f32.gmra.mrb[0].mxu0 %v385
      %v458 = vpop.f32.mrb[0].mxu0
      %v459 = vadd.f32 0.0, %v458
      %v460 = vpop.f32.mrb[0].mxu0
      %461 = vdwg.mxu0
      %vm462 = vcmask 15360
      %463 = vst.msk [vmem:[%s285] sm:$0xff] %vm462, %v454
      %464 = vst.msk [vmem:[%s285 + $0x8] sm:$0xff] %vm462, %v459
      %s465 = smul.u32 2, %s21
      %p466 = scmp.lt.s32.totalorder %s20, 1
      %s467 = scalar_select %p466, %s20, 1
      %p468 = scmp.lt.s32.totalorder %s465, 5
      %s469 = scalar_select %p468, %s465, 5
      %s470 = smul.addr %s467, 6
      %s471 = sadd.s32 %s469, %s470
      %s472 = smul.addr %s471, 8
      %s473 = scalar_lea.vmem %s3, %s472
      %s474 = smul.u32 2, %s21
      %p475 = scmp.lt.s32.totalorder %s20, 1
      %s476 = scalar_select %p475, %s20, 1
      %p477 = scmp.lt.s32.totalorder %s474, 5
      %s478 = scalar_select %p477, %s474, 5
      %s479 = smul.addr %s476, 6
      %s480 = sadd.s32 %s478, %s479
      %s481 = smul.addr %s480, 8
      %s482 = scalar_lea.vmem %s4, %s481
      // Predicated region
      $region33: #{tpu_custom_call.1} parent=31 // pred_check
        %p483 = pneg %p126
      $region34: #{tpu_custom_call.1} parent=31 // pred_check_branch
        %485 = sbr.rel (%p483) target = $region36
      $region35: #{tpu_custom_call.1} parent=31 // pred_region
        %s486 = smul.u32 2, %s21
      $region36: #{tpu_custom_call.1} parent=31 // pred_fallthru
        _
      // Predicated region
      $region37: #{tpu_custom_call.1} parent=31 // pred_check
        %p487 = pneg %p154
      $region38: #{tpu_custom_call.1} parent=31 // pred_check_branch
        %489 = sbr.rel (%p487) target = $region40
      $region39: #{tpu_custom_call.1} parent=31 // pred_region
        %s490 = smul.u32 2, %s21
      $region40: #{tpu_custom_call.1} parent=31 // pred_fallthru
        _
    $region32: #{tpu_custom_call.1} parent=5 // pred_fallthru
      _
    %p491 = scmp.le.s32.totalorder 2, %s11
    // Predicated region
    $region41: #{tpu_custom_call.1} parent=5 // pred_check
      %p492 = pneg %p491
    $region42: #{tpu_custom_call.1} parent=5 // pred_check_branch
      %494 = sbr.rel (%p492) target = $region44
    $region43: #{tpu_custom_call.1} parent=5 // pred_region
      %s495 = ssub.s32 %s11, 2
      // Predicated region
      $region45: #{tpu_custom_call.1} parent=43 // pred_check
        %p496 = pneg %p132
      $region46: #{tpu_custom_call.1} parent=43 // pred_check_branch
        %498 = sbr.rel (%p496) target = $region48
      $region47: #{tpu_custom_call.1} parent=43 // pred_region
        %s499 = smul.u32 2, %s23
        %p500 = scmp.lt.s32.totalorder %s22, 1
        %s501 = scalar_select %p500, %s22, 1
        %p502 = scmp.lt.s32.totalorder %s499, 5
        %s503 = scalar_select %p502, %s499, 5
        %s504 = smul.addr %s501, 6
        %s505 = sadd.s32 %s503, %s504
        %s506 = smul.addr %s505, 8
        %s507 = scalar_lea.vmem %s3, %s506
      $region48: #{tpu_custom_call.1} parent=43 // pred_fallthru
        _
      // Predicated region
      $region49: #{tpu_custom_call.1} parent=43 // pred_check
        %p508 = pneg %p160
      $region50: #{tpu_custom_call.1} parent=43 // pred_check_branch
        %510 = sbr.rel (%p508) target = $region52
      $region51: #{tpu_custom_call.1} parent=43 // pred_region
        %s511 = smul.u32 2, %s23
        %p512 = scmp.lt.s32.totalorder %s22, 1
        %s513 = scalar_select %p512, %s22, 1
        %p514 = scmp.lt.s32.totalorder %s511, 5
        %s515 = scalar_select %p514, %s511, 5
        %s516 = smul.addr %s513, 6
        %s517 = sadd.s32 %s515, %s516
        %s518 = smul.addr %s517, 8
        %s519 = scalar_lea.vmem %s4, %s518
      $region52: #{tpu_custom_call.1} parent=43 // pred_fallthru
        _
    $region44: #{tpu_custom_call.1} parent=5 // pred_fallthru
      _
  $region6: #{tpu_custom_call.1} parent=0 // loop_footer
    %s15 = sadd.s32 1, %s11
  $region7: #{tpu_custom_call.1} parent=0 // loop_footer_branch
    %10 = sbr.rel target = $region3
  $region8: #{tpu_custom_call.1} parent=0 // loop_exit
    _

</llo_original>
